<compile_context>
chip_gen: v7x
topology: tpu7x:2x2x1
jax: 0.10.0
libtpu: 0.0.40
codegen_flags: <defaults>
</compile_context>

<pallas_src>
import functools

import jax
import jax.numpy as jnp
from jax.experimental import pallas as pl
from jax.experimental.pallas import tpu as pltpu

_EPS = 1e-5  # nn.BatchNorm1d default eps


def _barlow_twins_kernel(za_ref, zb_ref, loss_ref,
                         s_acc, sum_a, sum_b, ssq_a, ssq_b, spd,
                         *, lambd: float, n_total: int):
    i = pl.program_id(0)

    @pl.when(i == 0)
    def _init():
        s_acc[...] = jnp.zeros_like(s_acc)
        sum_a[...] = jnp.zeros_like(sum_a)
        sum_b[...] = jnp.zeros_like(sum_b)
        ssq_a[...] = jnp.zeros_like(ssq_a)
        ssq_b[...] = jnp.zeros_like(ssq_b)
        spd[...] = jnp.zeros_like(spd)

    za = za_ref[...]          # (TILE_N, D), native dtype -> straight to MXU
    zb = zb_ref[...]

    # MXU: S += za^T @ zb, accumulated in f32 (contraction over the batch axis).
    s_acc[...] += jax.lax.dot_general(
        za, zb,
        dimension_numbers=(((0,), (0,)), ((), ())),
        preferred_element_type=jnp.float32)

    # Per-feature statistics in f32 (VPU): batch sums, sums of squares, and the
    # per-feature cross-product sum_n a[n,d]*b[n,d] (== diag of S).
    za32 = za.astype(jnp.float32)
    zb32 = zb.astype(jnp.float32)
    sum_a[...] += jnp.sum(za32, axis=0, keepdims=True)
    sum_b[...] += jnp.sum(zb32, axis=0, keepdims=True)
    ssq_a[...] += jnp.sum(za32 * za32, axis=0, keepdims=True)
    ssq_b[...] += jnp.sum(zb32 * zb32, axis=0, keepdims=True)
    spd[...] += jnp.sum(za32 * zb32, axis=0, keepdims=True)

    @pl.when(i == pl.num_programs(0) - 1)
    def _finalize():
        d = s_acc.shape[0]
        inv_n = jnp.float32(1.0 / n_total)

        mu_a = sum_a[...] * inv_n                       # (1, D)
        mu_b = sum_b[...] * inv_n
        var_a = ssq_a[...] * inv_n - mu_a * mu_a        # biased var (BN training)
        var_b = ssq_b[...] * inv_n - mu_b * mu_b
        u = jax.lax.rsqrt(var_a + _EPS)                 # 1/sqrt(var_a + eps)
        v = jax.lax.rsqrt(var_b + _EPS)

        # diag(c)[j] = (spd[j]/N - mu_a[j]*mu_b[j]) * u[j] * v[j]
        diag_c = (spd[...] * inv_n - mu_a * mu_b) * u * v
        sum_diag = jnp.sum(diag_c)
        sum_diag_sq = jnp.sum(diag_c * diag_c)

        # sum_{ij} c_ij^2 with c_ij = (S_ij/N - mu_a_i mu_b_j) u_i v_j, expanded:
        #   term1 = (1/N^2) * sum_j v_j^2 * [u^2 @ (S*S)]_j
        #   term2 = -(2/N)  * sum_j (mu_b*v^2)_j * [(mu_a*u^2) @ S]_j
        #   term3 = (sum_i mu_a_i^2 u_i^2) * (sum_j mu_b_j^2 v_j^2)
        u2 = u * u
        v2 = v * v
        s_val = s_acc[...]
        w1 = jax.lax.dot_general(                       # (1, D)
            u2, s_val * s_val,
            dimension_numbers=(((1,), (0,)), ((), ())),
            preferred_element_type=jnp.float32)
        w2 = jax.lax.dot_general(                       # (1, D)
            mu_a * u2, s_val,
            dimension_numbers=(((1,), (0,)), ((), ())),
            preferred_element_type=jnp.float32)
        term1 = inv_n * inv_n * jnp.sum(w1 * v2)
        term2 = -2.0 * inv_n * jnp.sum(w2 * (mu_b * v2))
        term3 = jnp.sum(mu_a * mu_a * u2) * jnp.sum(mu_b * mu_b * v2)
        sum_c2 = term1 + term2 + term3

        # loss = sum_i (c_ii - 1)^2 + lambd * sum_{i != j} c_ij^2
        #      = (1-lambd)*sum(diag^2) - 2*sum(diag) + D + lambd*sum(c^2)
        loss_ref[0, 0] = ((1.0 - lambd) * sum_diag_sq
                          - 2.0 * sum_diag
                          + jnp.float32(d)
                          + lambd * sum_c2)


def barlow_twins_head(z_a, z_b, lambd: float = 0.0051, tile_n: int | None = None):
    """Returns {'loss': scalar} matching BarlowTwinsHead.forward."""
    assert z_a.shape == z_b.shape and z_a.ndim == 2
    N, D = z_a.shape

    if tile_n is None:
        tile_n = N
        for cand in (512, 256, 128, 64, 32, 16, 8):   # multiple of 8 sublanes
            if N % cand == 0:
                tile_n = cand
                break
    assert N % tile_n == 0
    grid = (N // tile_n,)

    kernel = functools.partial(_barlow_twins_kernel,
                               lambd=float(lambd), n_total=int(N))

    # VMEM budget: f32 accumulator + epilogue (D,D) temporaries + double-
    # buffered input tiles, with headroom; clamp to the v7x physical 64 MiB.
    dd_bytes = D * D * 4
    tile_bytes = 2 * 2 * tile_n * D * jnp.dtype(z_a.dtype).itemsize
    vmem_bytes = 3 * dd_bytes + tile_bytes + (2 << 20)
    vmem_bytes = int(min(max(vmem_bytes, 16 << 20), 64 << 20))

    loss = pl.pallas_call(
        kernel,
        out_shape=jax.ShapeDtypeStruct((1, 1), jnp.float32),
        grid_spec=pltpu.PrefetchScalarGridSpec(
            num_scalar_prefetch=0,
            grid=grid,
            in_specs=[
                pl.BlockSpec((tile_n, D), lambda i: (i, 0)),
                pl.BlockSpec((tile_n, D), lambda i: (i, 0)),
            ],
            out_specs=pl.BlockSpec((1, 1), lambda i: (0, 0),
                                   memory_space=pltpu.MemorySpace.SMEM),
            scratch_shapes=[
                pltpu.VMEM((D, D), jnp.float32),   # S accumulator
                pltpu.VMEM((1, D), jnp.float32),   # sum_a
                pltpu.VMEM((1, D), jnp.float32),   # sum_b
                pltpu.VMEM((1, D), jnp.float32),   # ssq_a
                pltpu.VMEM((1, D), jnp.float32),   # ssq_b
                pltpu.VMEM((1, D), jnp.float32),   # spd = sum_n a*b per feature
            ],
        ),
        compiler_params=pltpu.CompilerParams(
            dimension_semantics=("arbitrary",),    # N axis is a reduction
            vmem_limit_bytes=vmem_bytes,
        ),
    )(z_a, z_b)
    return {"loss": loss[0, 0]}


def _reference(z_a, z_b, lambd=0.0051):
    def _bn(x):
        m = x.mean(0, keepdims=True)
        v = ((x - m) ** 2).mean(0, keepdims=True)
        return (x - m) / jnp.sqrt(v + _EPS)

    n, d = z_a.shape
    c = _bn(z_a).T @ _bn(z_b) / n
    on = jnp.sum((jnp.diag(c) - 1.0) ** 2)
    off = jnp.sum(c ** 2) - jnp.sum(jnp.diag(c) ** 2)
    return on + lambd * off


if __name__ == "__main__":
    key = jax.random.PRNGKey(0)
    ka, kb = jax.random.split(key)
    N, D = 32, 128  # small shapes; module default dimension=2048
    z_a = jax.random.normal(ka, (N, D), dtype=jnp.float32)
    z_b = jax.random.normal(kb, (N, D), dtype=jnp.float32)

    out = barlow_twins_head(z_a, z_b, tile_n=8)   # grid of 4 streaming steps
    loss = jax.block_until_ready(out["loss"])

    ref = _reference(z_a, z_b)
    assert jnp.allclose(loss, ref, rtol=1e-4, atol=1e-4), (loss, ref)
    print("KERNEL_OK")
</pallas_src>

<mosaic_0001>
module attributes {stable_mosaic.version = 11 : i64} {
  func.func @_barlow_twins_kernel(%arg0: i32, %arg1: memref<8x128xf32, #tpu.memory_space<vmem>>, %arg2: memref<8x128xf32, #tpu.memory_space<vmem>>, %arg3: memref<1x1xf32, #tpu.memory_space<smem>>, %arg4: memref<128x128xf32, #tpu.memory_space<vmem>>, %arg5: memref<1x128xf32, #tpu.memory_space<vmem>>, %arg6: memref<1x128xf32, #tpu.memory_space<vmem>>, %arg7: memref<1x128xf32, #tpu.memory_space<vmem>>, %arg8: memref<1x128xf32, #tpu.memory_space<vmem>>, %arg9: memref<1x128xf32, #tpu.memory_space<vmem>>) attributes {dimension_semantics = [#tpu.dimension_semantics<arbitrary>], iteration_bounds = array<i64: 4>, scalar_prefetch = 0 : i64, scratch_operands = 6 : i64, tpu.core_type = #tpu.core_type<tc>, window_params = [{transform_indices = @transform_0, window_bounds = array<i64: 8, 128>}, {transform_indices = @transform_1, window_bounds = array<i64: 8, 128>}, {transform_indices = @transform_2, window_bounds = array<i64: 1, 1>}]} {
    %c0_i32 = arith.constant 0 : i32
    %0 = arith.cmpi eq, %arg0, %c0_i32 : i32
    %1 = arith.extui %0 : i1 to i32
    %c0_i32_0 = arith.constant 0 : i32
    %2 = arith.cmpi ne, %1, %c0_i32_0 : i32
    scf.if %2 {
      %cst_34 = arith.constant 0.000000e+00 : f32
      %40 = vector.broadcast %cst_34 : f32 to vector<128x128xf32>
      %c0_35 = arith.constant 0 : index
      %c0_36 = arith.constant 0 : index
      %41 = vector.load %arg4[%c0_35, %c0_36] : memref<128x128xf32, #tpu.memory_space<vmem>>, vector<128x128xf32>
      tpu.vector_store %arg4[%c0_35, %c0_36], %40 {strides = array<i32>} : memref<128x128xf32, #tpu.memory_space<vmem>>, vector<128x128xf32>,
      %cst_37 = arith.constant 0.000000e+00 : f32
      %42 = vector.broadcast %cst_37 : f32 to vector<1x128xf32>
      %c0_38 = arith.constant 0 : index
      %c0_39 = arith.constant 0 : index
      %43 = vector.load %arg5[%c0_38, %c0_39] : memref<1x128xf32, #tpu.memory_space<vmem>>, vector<1x128xf32>
      tpu.vector_store %arg5[%c0_38, %c0_39], %42 {strides = array<i32>} : memref<1x128xf32, #tpu.memory_space<vmem>>, vector<1x128xf32>,
      %cst_40 = arith.constant 0.000000e+00 : f32
      %44 = vector.broadcast %cst_40 : f32 to vector<1x128xf32>
      %c0_41 = arith.constant 0 : index
      %c0_42 = arith.constant 0 : index
      %45 = vector.load %arg6[%c0_41, %c0_42] : memref<1x128xf32, #tpu.memory_space<vmem>>, vector<1x128xf32>
      tpu.vector_store %arg6[%c0_41, %c0_42], %44 {strides = array<i32>} : memref<1x128xf32, #tpu.memory_space<vmem>>, vector<1x128xf32>,
      %cst_43 = arith.constant 0.000000e+00 : f32
      %46 = vector.broadcast %cst_43 : f32 to vector<1x128xf32>
      %c0_44 = arith.constant 0 : index
      %c0_45 = arith.constant 0 : index
      %47 = vector.load %arg7[%c0_44, %c0_45] : memref<1x128xf32, #tpu.memory_space<vmem>>, vector<1x128xf32>
      tpu.vector_store %arg7[%c0_44, %c0_45], %46 {strides = array<i32>} : memref<1x128xf32, #tpu.memory_space<vmem>>, vector<1x128xf32>,
      %cst_46 = arith.constant 0.000000e+00 : f32
      %48 = vector.broadcast %cst_46 : f32 to vector<1x128xf32>
      %c0_47 = arith.constant 0 : index
      %c0_48 = arith.constant 0 : index
      %49 = vector.load %arg8[%c0_47, %c0_48] : memref<1x128xf32, #tpu.memory_space<vmem>>, vector<1x128xf32>
      tpu.vector_store %arg8[%c0_47, %c0_48], %48 {strides = array<i32>} : memref<1x128xf32, #tpu.memory_space<vmem>>, vector<1x128xf32>,
      %cst_49 = arith.constant 0.000000e+00 : f32
      %50 = vector.broadcast %cst_49 : f32 to vector<1x128xf32>
      %c0_50 = arith.constant 0 : index
      %c0_51 = arith.constant 0 : index
      %51 = vector.load %arg9[%c0_50, %c0_51] : memref<1x128xf32, #tpu.memory_space<vmem>>, vector<1x128xf32>
      tpu.vector_store %arg9[%c0_50, %c0_51], %50 {strides = array<i32>} : memref<1x128xf32, #tpu.memory_space<vmem>>, vector<1x128xf32>,
    } else {
    }
    %c0 = arith.constant 0 : index
    %c0_1 = arith.constant 0 : index
    %3 = vector.load %arg1[%c0, %c0_1] : memref<8x128xf32, #tpu.memory_space<vmem>>, vector<8x128xf32>
    %c0_2 = arith.constant 0 : index
    %c0_3 = arith.constant 0 : index
    %4 = vector.load %arg2[%c0_2, %c0_3] : memref<8x128xf32, #tpu.memory_space<vmem>>, vector<8x128xf32>
    %c0_4 = arith.constant 0 : index
    %c0_5 = arith.constant 0 : index
    %5 = vector.load %arg4[%c0_4, %c0_5] : memref<128x128xf32, #tpu.memory_space<vmem>>, vector<128x128xf32>
    %cst = arith.constant dense<0.000000e+00> : vector<128x128xf32>
    %6 = tpu.matmul %3, %4, %cst {dimension_numbers = #tpu.dot_dimension_numbers<[0], [0], [1], [1], [0, 1, 1, 1], [], []>} : vector<8x128xf32>, vector<8x128xf32>, vector<128x128xf32> -> vector<128x128xf32>
    %7 = arith.addf %5, %6 : vector<128x128xf32>
    %c0_6 = arith.constant 0 : index
    %c0_7 = arith.constant 0 : index
    %8 = vector.load %arg4[%c0_6, %c0_7] : memref<128x128xf32, #tpu.memory_space<vmem>>, vector<128x128xf32>
    tpu.vector_store %arg4[%c0_6, %c0_7], %7 {strides = array<i32>} : memref<128x128xf32, #tpu.memory_space<vmem>>, vector<128x128xf32>,
    %c0_8 = arith.constant 0 : index
    %c0_9 = arith.constant 0 : index
    %9 = vector.load %arg5[%c0_8, %c0_9] : memref<1x128xf32, #tpu.memory_space<vmem>>, vector<1x128xf32>
    %cst_10 = arith.constant dense<0.000000e+00> : vector<128xf32>
    %10 = vector.multi_reduction <add>, %3, %cst_10 [0] : vector<8x128xf32> to vector<128xf32>
    %11 = vector.shape_cast %10 : vector<128xf32> to vector<1x128xf32>
    %12 = arith.addf %9, %11 : vector<1x128xf32>
    %c0_11 = arith.constant 0 : index
    %c0_12 = arith.constant 0 : index
    %13 = vector.load %arg5[%c0_11, %c0_12] : memref<1x128xf32, #tpu.memory_space<vmem>>, vector<1x128xf32>
    tpu.vector_store %arg5[%c0_11, %c0_12], %12 {strides = array<i32>} : memref<1x128xf32, #tpu.memory_space<vmem>>, vector<1x128xf32>,
    %c0_13 = arith.constant 0 : index
    %c0_14 = arith.constant 0 : index
    %14 = vector.load %arg6[%c0_13, %c0_14] : memref<1x128xf32, #tpu.memory_space<vmem>>, vector<1x128xf32>
    %cst_15 = arith.constant dense<0.000000e+00> : vector<128xf32>
    %15 = vector.multi_reduction <add>, %4, %cst_15 [0] : vector<8x128xf32> to vector<128xf32>
    %16 = vector.shape_cast %15 : vector<128xf32> to vector<1x128xf32>
    %17 = arith.addf %14, %16 : vector<1x128xf32>
    %c0_16 = arith.constant 0 : index
    %c0_17 = arith.constant 0 : index
    %18 = vector.load %arg6[%c0_16, %c0_17] : memref<1x128xf32, #tpu.memory_space<vmem>>, vector<1x128xf32>
    tpu.vector_store %arg6[%c0_16, %c0_17], %17 {strides = array<i32>} : memref<1x128xf32, #tpu.memory_space<vmem>>, vector<1x128xf32>,
    %c0_18 = arith.constant 0 : index
    %c0_19 = arith.constant 0 : index
    %19 = vector.load %arg7[%c0_18, %c0_19] : memref<1x128xf32, #tpu.memory_space<vmem>>, vector<1x128xf32>
    %20 = arith.mulf %3, %3 : vector<8x128xf32>
    %cst_20 = arith.constant dense<0.000000e+00> : vector<128xf32>
    %21 = vector.multi_reduction <add>, %20, %cst_20 [0] : vector<8x128xf32> to vector<128xf32>
    %22 = vector.shape_cast %21 : vector<128xf32> to vector<1x128xf32>
    %23 = arith.addf %19, %22 : vector<1x128xf32>
    %c0_21 = arith.constant 0 : index
    %c0_22 = arith.constant 0 : index
    %24 = vector.load %arg7[%c0_21, %c0_22] : memref<1x128xf32, #tpu.memory_space<vmem>>, vector<1x128xf32>
    tpu.vector_store %arg7[%c0_21, %c0_22], %23 {strides = array<i32>} : memref<1x128xf32, #tpu.memory_space<vmem>>, vector<1x128xf32>,
    %c0_23 = arith.constant 0 : index
    %c0_24 = arith.constant 0 : index
    %25 = vector.load %arg8[%c0_23, %c0_24] : memref<1x128xf32, #tpu.memory_space<vmem>>, vector<1x128xf32>
    %26 = arith.mulf %4, %4 : vector<8x128xf32>
    %cst_25 = arith.constant dense<0.000000e+00> : vector<128xf32>
    %27 = vector.multi_reduction <add>, %26, %cst_25 [0] : vector<8x128xf32> to vector<128xf32>
    %28 = vector.shape_cast %27 : vector<128xf32> to vector<1x128xf32>
    %29 = arith.addf %25, %28 : vector<1x128xf32>
    %c0_26 = arith.constant 0 : index
    %c0_27 = arith.constant 0 : index
    %30 = vector.load %arg8[%c0_26, %c0_27] : memref<1x128xf32, #tpu.memory_space<vmem>>, vector<1x128xf32>
    tpu.vector_store %arg8[%c0_26, %c0_27], %29 {strides = array<i32>} : memref<1x128xf32, #tpu.memory_space<vmem>>, vector<1x128xf32>,
    %c0_28 = arith.constant 0 : index
    %c0_29 = arith.constant 0 : index
    %31 = vector.load %arg9[%c0_28, %c0_29] : memref<1x128xf32, #tpu.memory_space<vmem>>, vector<1x128xf32>
    %32 = arith.mulf %3, %4 : vector<8x128xf32>
    %cst_30 = arith.constant dense<0.000000e+00> : vector<128xf32>
    %33 = vector.multi_reduction <add>, %32, %cst_30 [0] : vector<8x128xf32> to vector<128xf32>
    %34 = vector.shape_cast %33 : vector<128xf32> to vector<1x128xf32>
    %35 = arith.addf %31, %34 : vector<1x128xf32>
    %c0_31 = arith.constant 0 : index
    %c0_32 = arith.constant 0 : index
    %36 = vector.load %arg9[%c0_31, %c0_32] : memref<1x128xf32, #tpu.memory_space<vmem>>, vector<1x128xf32>
    tpu.vector_store %arg9[%c0_31, %c0_32], %35 {strides = array<i32>} : memref<1x128xf32, #tpu.memory_space<vmem>>, vector<1x128xf32>,
    %c3_i32 = arith.constant 3 : i32
    %37 = arith.cmpi eq, %arg0, %c3_i32 : i32
    %38 = arith.extui %37 : i1 to i32
    %c0_i32_33 = arith.constant 0 : i32
    %39 = arith.cmpi ne, %38, %c0_i32_33 : i32
    scf.if %39 {
      %c0_34 = arith.constant 0 : index
      %c0_35 = arith.constant 0 : index
      %40 = vector.load %arg5[%c0_34, %c0_35] : memref<1x128xf32, #tpu.memory_space<vmem>>, vector<1x128xf32>
      %cst_36 = arith.constant 3.125000e-02 : f32
      %41 = vector.broadcast %cst_36 : f32 to vector<1x128xf32>
      %42 = arith.mulf %40, %41 : vector<1x128xf32>
      %c0_37 = arith.constant 0 : index
      %c0_38 = arith.constant 0 : index
      %43 = vector.load %arg6[%c0_37, %c0_38] : memref<1x128xf32, #tpu.memory_space<vmem>>, vector<1x128xf32>
      %cst_39 = arith.constant 3.125000e-02 : f32
      %44 = vector.broadcast %cst_39 : f32 to vector<1x128xf32>
      %45 = arith.mulf %43, %44 : vector<1x128xf32>
      %c0_40 = arith.constant 0 : index
      %c0_41 = arith.constant 0 : index
      %46 = vector.load %arg7[%c0_40, %c0_41] : memref<1x128xf32, #tpu.memory_space<vmem>>, vector<1x128xf32>
      %cst_42 = arith.constant 3.125000e-02 : f32
      %47 = vector.broadcast %cst_42 : f32 to vector<1x128xf32>
      %48 = arith.mulf %46, %47 : vector<1x128xf32>
      %49 = arith.mulf %42, %42 : vector<1x128xf32>
      %50 = arith.subf %48, %49 : vector<1x128xf32>
      %c0_43 = arith.constant 0 : index
      %c0_44 = arith.constant 0 : index
      %51 = vector.load %arg8[%c0_43, %c0_44] : memref<1x128xf32, #tpu.memory_space<vmem>>, vector<1x128xf32>
      %cst_45 = arith.constant 3.125000e-02 : f32
      %52 = vector.broadcast %cst_45 : f32 to vector<1x128xf32>
      %53 = arith.mulf %51, %52 : vector<1x128xf32>
      %54 = arith.mulf %45, %45 : vector<1x128xf32>
      %55 = arith.subf %53, %54 : vector<1x128xf32>
      %cst_46 = arith.constant 9.99999974E-6 : f32
      %56 = vector.broadcast %cst_46 : f32 to vector<1x128xf32>
      %57 = arith.addf %50, %56 : vector<1x128xf32>
      %58 = math.rsqrt %57 : vector<1x128xf32>
      %cst_47 = arith.constant 9.99999974E-6 : f32
      %59 = vector.broadcast %cst_47 : f32 to vector<1x128xf32>
      %60 = arith.addf %55, %59 : vector<1x128xf32>
      %61 = math.rsqrt %60 : vector<1x128xf32>
      %c0_48 = arith.constant 0 : index
      %c0_49 = arith.constant 0 : index
      %62 = vector.load %arg9[%c0_48, %c0_49] : memref<1x128xf32, #tpu.memory_space<vmem>>, vector<1x128xf32>
      %cst_50 = arith.constant 3.125000e-02 : f32
      %63 = vector.broadcast %cst_50 : f32 to vector<1x128xf32>
      %64 = arith.mulf %62, %63 : vector<1x128xf32>
      %65 = arith.mulf %42, %45 : vector<1x128xf32>
      %66 = arith.subf %64, %65 : vector<1x128xf32>
      %67 = arith.mulf %66, %58 : vector<1x128xf32>
      %68 = arith.mulf %67, %61 : vector<1x128xf32>
      %69 = vector.shape_cast %68 : vector<1x128xf32> to vector<1x1x128xf32>
      %cst_51 = arith.constant dense<0.000000e+00> : vector<1xf32>
      %70 = vector.multi_reduction <add>, %69, %cst_51 [1, 2] : vector<1x1x128xf32> to vector<1xf32>
      %71 = vector.shape_cast %70 : vector<1xf32> to vector<1x1x1xf32>
      %72 = vector.extract %71[0, 0, 0] : f32 from vector<1x1x1xf32>
      %73 = arith.mulf %68, %68 : vector<1x128xf32>
      %74 = vector.shape_cast %73 : vector<1x128xf32> to vector<1x1x128xf32>
      %cst_52 = arith.constant dense<0.000000e+00> : vector<1xf32>
      %75 = vector.multi_reduction <add>, %74, %cst_52 [1, 2] : vector<1x1x128xf32> to vector<1xf32>
      %76 = vector.shape_cast %75 : vector<1xf32> to vector<1x1x1xf32>
      %77 = vector.extract %76[0, 0, 0] : f32 from vector<1x1x1xf32>
      %78 = arith.mulf %58, %58 : vector<1x128xf32>
      %79 = arith.mulf %61, %61 : vector<1x128xf32>
      %c0_53 = arith.constant 0 : index
      %c0_54 = arith.constant 0 : index
      %80 = vector.load %arg4[%c0_53, %c0_54] : memref<128x128xf32, #tpu.memory_space<vmem>>, vector<128x128xf32>
      %81 = arith.mulf %80, %80 : vector<128x128xf32>
      %cst_55 = arith.constant dense<0.000000e+00> : vector<1x128xf32>
      %82 = tpu.matmul %78, %81, %cst_55 {dimension_numbers = #tpu.dot_dimension_numbers<[1], [0], [0], [1], [0, 0, 1, 1], [], []>} : vector<1x128xf32>, vector<128x128xf32>, vector<1x128xf32> -> vector<1x128xf32>
      %83 = arith.mulf %42, %78 : vector<1x128xf32>
      %cst_56 = arith.constant dense<0.000000e+00> : vector<1x128xf32>
      %84 = tpu.matmul %83, %80, %cst_56 {dimension_numbers = #tpu.dot_dimension_numbers<[1], [0], [0], [1], [0, 0, 1, 1], [], []>} : vector<1x128xf32>, vector<128x128xf32>, vector<1x128xf32> -> vector<1x128xf32>
      %cst_57 = arith.constant 3.125000e-02 : f32
      %cst_58 = arith.constant 3.125000e-02 : f32
      %85 = arith.mulf %cst_57, %cst_58 : f32
      %86 = arith.mulf %82, %79 : vector<1x128xf32>
      %87 = vector.shape_cast %86 : vector<1x128xf32> to vector<1x1x128xf32>
      %cst_59 = arith.constant dense<0.000000e+00> : vector<1xf32>
      %88 = vector.multi_reduction <add>, %87, %cst_59 [1, 2] : vector<1x1x128xf32> to vector<1xf32>
      %89 = vector.shape_cast %88 : vector<1xf32> to vector<1x1x1xf32>
      %90 = vector.extract %89[0, 0, 0] : f32 from vector<1x1x1xf32>
      %91 = arith.mulf %85, %90 : f32
      %cst_60 = arith.constant -2.000000e+00 : f32
      %cst_61 = arith.constant 3.125000e-02 : f32
      %92 = arith.mulf %cst_60, %cst_61 : f32
      %93 = arith.mulf %45, %79 : vector<1x128xf32>
      %94 = arith.mulf %84, %93 : vector<1x128xf32>
      %95 = vector.shape_cast %94 : vector<1x128xf32> to vector<1x1x128xf32>
      %cst_62 = arith.constant dense<0.000000e+00> : vector<1xf32>
      %96 = vector.multi_reduction <add>, %95, %cst_62 [1, 2] : vector<1x1x128xf32> to vector<1xf32>
      %97 = vector.shape_cast %96 : vector<1xf32> to vector<1x1x1xf32>
      %98 = vector.extract %97[0, 0, 0] : f32 from vector<1x1x1xf32>
      %99 = arith.mulf %92, %98 : f32
      %100 = arith.mulf %42, %42 : vector<1x128xf32>
      %101 = arith.mulf %100, %78 : vector<1x128xf32>
      %102 = vector.shape_cast %101 : vector<1x128xf32> to vector<1x1x128xf32>
      %cst_63 = arith.constant dense<0.000000e+00> : vector<1xf32>
      %103 = vector.multi_reduction <add>, %102, %cst_63 [1, 2] : vector<1x1x128xf32> to vector<1xf32>
      %104 = vector.shape_cast %103 : vector<1xf32> to vector<1x1x1xf32>
      %105 = vector.extract %104[0, 0, 0] : f32 from vector<1x1x1xf32>
      %106 = arith.mulf %45, %45 : vector<1x128xf32>
      %107 = arith.mulf %106, %79 : vector<1x128xf32>
      %108 = vector.shape_cast %107 : vector<1x128xf32> to vector<1x1x128xf32>
      %cst_64 = arith.constant dense<0.000000e+00> : vector<1xf32>
      %109 = vector.multi_reduction <add>, %108, %cst_64 [1, 2] : vector<1x1x128xf32> to vector<1xf32>
      %110 = vector.shape_cast %109 : vector<1xf32> to vector<1x1x1xf32>
      %111 = vector.extract %110[0, 0, 0] : f32 from vector<1x1x1xf32>
      %112 = arith.mulf %105, %111 : f32
      %113 = arith.addf %91, %99 : f32
      %114 = arith.addf %113, %112 : f32
      %cst_65 = arith.constant 0.994899988 : f32
      %115 = arith.mulf %cst_65, %77 : f32
      %cst_66 = arith.constant 2.000000e+00 : f32
      %116 = arith.mulf %cst_66, %72 : f32
      %117 = arith.subf %115, %116 : f32
      %cst_67 = arith.constant 1.280000e+02 : f32
      %118 = arith.addf %117, %cst_67 : f32
      %cst_68 = arith.constant 5.100000e-03 : f32
      %119 = arith.mulf %cst_68, %114 : f32
      %120 = arith.addf %118, %119 : f32
      %c0_69 = arith.constant 0 : index
      %c0_70 = arith.constant 0 : index
      %121 = memref.load %arg3[%c0_69, %c0_70] : memref<1x1xf32, #tpu.memory_space<smem>>
      memref.store %120, %arg3[%c0_69, %c0_70] : memref<1x1xf32, #tpu.memory_space<smem>>
    } else {
    }
    return
  }
  func.func @transform_0(%arg0: i32) -> (i32, i32) {
    %c0_i32 = arith.constant 0 : i32
    %c0_i32_0 = arith.constant 0 : i32
    return %arg0, %c0_i32 : i32, i32
  }
  func.func @transform_1(%arg0: i32) -> (i32, i32) {
    %c0_i32 = arith.constant 0 : i32
    %c0_i32_0 = arith.constant 0 : i32
    return %arg0, %c0_i32 : i32, i32
  }
  func.func @transform_2(%arg0: i32) -> (i32, i32) {
    %c0_i32 = arith.constant 0 : i32
    %c0_i32_0 = arith.constant 0 : i32
    %c0_i32_1 = arith.constant 0 : i32
    return %c0_i32, %c0_i32_0 : i32, i32
  }
}

</mosaic_0001>

<llo_original>
// kernel: tpu_custom_call.1
$region0: #{tpu_custom_call.1}
  #allocation0 [shape = 'u32[]', space=smem, size = 0x4, offset = 0x4, fixed_abs, tag = 'smem constant byte address 0x4 - core index']
  #allocation1 [shape = 'u32[144,128]{1,0:T(1,128)}', space=vmem, size = 0x12000, scoped, tag = 'internal scratch']
  #allocation2 [shape = 'f32[128,128]{1,0:T(8,128)}', space=vmem, size = 0x10000, scoped, tag = 'scratch operand']
  #allocation3 [shape = 'f32[1,128]{1,0:T(1,128)}', space=vmem, size = 0x200, scoped, tag = 'scratch operand']
  #allocation4 [shape = 'f32[1,128]{1,0:T(1,128)}', space=vmem, size = 0x200, scoped, tag = 'scratch operand']
  #allocation5 [shape = 'f32[1,128]{1,0:T(1,128)}', space=vmem, size = 0x200, scoped, tag = 'scratch operand']
  #allocation6 [shape = 'f32[1,128]{1,0:T(1,128)}', space=vmem, size = 0x200, scoped, tag = 'scratch operand']
  #allocation7 [shape = 'f32[1,128]{1,0:T(1,128)}', space=vmem, size = 0x200, scoped, tag = 'scratch operand']
  %s0 = inlined_call_operand.hbm [shape: f32[32,128], index: 0, kind: input, shape index: {}]
  %s1 = inlined_call_operand.hbm [shape: f32[32,128], index: 1, kind: input, shape index: {}]
  %s2 = inlined_call_operand.hbm [shape: f32[1,1], index: 2, kind: output, shape index: {}]
  %s3 = sld [smem:[#allocation0]]
  $region57: #{tpu_custom_call.1} parent=0
    _
  %s5 = ssub.s32 1, %s3
  %s6 = scalar_select 0, %s5, %s3
  $region1: #{tpu_custom_call.1} parent=0
    #allocation8 [shape = 'u8[8192]{0}', space=vmem, size = 0x2000, scoped, tag = 'input window, operand 0']
    #allocation9 [shape = 's32[2]{0}', space=sflag, size = 0x8, scoped, tag = 'scoped memory for tpu_custom_call.1']
    #allocation10 [shape = 's32[2]{0}', space=sflag, size = 0x8, scoped, tag = 'scoped memory for tpu_custom_call.1']
    #allocation11 [shape = 'u8[8192]{0}', space=vmem, size = 0x2000, scoped, tag = 'input window, operand 1']
    #allocation12 [shape = 's32[2]{0}', space=sflag, size = 0x8, scoped, tag = 'scoped memory for tpu_custom_call.1']
    #allocation13 [shape = 'u8[512]{0}', space=smem, size = 0x200, scoped, tag = 'output window, operand 0, single buffered']
    %7 = vsyncpa [#allocation9], 0
    %s8 = scalar_lea.sflag [#allocation9], 1
    %9 = vsyncpa %s8, 0
    %10 = vsyncpa [#allocation12], 0
    %s11 = scalar_lea.sflag [#allocation12], 1
    %12 = vsyncpa %s11, 0
    %13 = vsyncpa [#allocation10], 0
    loop: start=0, step=1, limit=6
    $region2: #{tpu_custom_call.1} parent=1 // loop_pre_header
      _
    $region3: #{tpu_custom_call.1} parent=1 // loop_header
      %s15 = sphi 0, %s19
      %p16 = scmp.ge.s32.totalorder %s15, 6
      %s25 = sphi 0, %s27
      %s28 = sphi 0, %s25
      %s29 = sphi 0, %s28
      %s45 = sphi 0, %s29
      %s51 = sphi 0, %s53
      %s54 = sphi 0, %s51
      %s55 = sphi 0, %s54
      %s71 = sphi 0, %s55
      %s75 = sphi 0, %s75
      %s77 = sphi 0, %s75
      %s78 = sphi 0, %s77
      %s92 = sphi 0, %s78
    $region4: #{tpu_custom_call.1} parent=1 // loop_header_branch
      %18 = sbr.rel (%p16) target = $region8
    $region5: #{tpu_custom_call.1} parent=1 // loop_body
      %s20 = ssub.s32 %s15, 1
      %s21 = ssub.s32 %s15, 2
      %s22 = sadd.s32 %s15, 1
      %s23 = ssub.s32 %s15, %s22
      %p24 = scmp.eq.s32.totalorder %s23, 0
      %s26 = sadd.s32 %s25, 1
      %s27 = scalar_select %p24, %s25, %s26
      %p30 = pneg %p24
      %p31 = scmp.eq.s32.totalorder %s15, 3
      %p32 = por %p30, %p31
      %p33 = scmp.ne.s32.totalorder %s25, %s28
      %p34 = scmp.eq.s32.totalorder %s15, 0
      %p35 = por %p33, %p34
      %p36 = scmp.ne.s32.totalorder %s25, %s28
      %p37 = scmp.eq.s32.totalorder %s20, 3
      %p38 = por %p36, %p37
      %p39 = scmp.ne.s32.totalorder %s28, %s29
      %p40 = scmp.eq.s32.totalorder %s20, 0
      %p41 = por %p39, %p40
      %p42 = scmp.ne.s32.totalorder %s28, %s29
      %p43 = scmp.eq.s32.totalorder %s21, 3
      %p44 = por %p42, %p43
      %p46 = scmp.ne.s32.totalorder %s29, %s45
      %p47 = scmp.eq.s32.totalorder %s21, 0
      %p48 = por %p46, %p47
      %s49 = ssub.s32 %s15, %s22
      %p50 = scmp.eq.s32.totalorder %s49, 0
      %s52 = sadd.s32 %s51, 1
      %s53 = scalar_select %p50, %s51, %s52
      %p56 = pneg %p50
      %p57 = scmp.eq.s32.totalorder %s15, 3
      %p58 = por %p56, %p57
      %p59 = scmp.ne.s32.totalorder %s51, %s54
      %p60 = scmp.eq.s32.totalorder %s15, 0
      %p61 = por %p59, %p60
      %p62 = scmp.ne.s32.totalorder %s51, %s54
      %p63 = scmp.eq.s32.totalorder %s20, 3
      %p64 = por %p62, %p63
      %p65 = scmp.ne.s32.totalorder %s54, %s55
      %p66 = scmp.eq.s32.totalorder %s20, 0
      %p67 = por %p65, %p66
      %p68 = scmp.ne.s32.totalorder %s54, %s55
      %p69 = scmp.eq.s32.totalorder %s21, 3
      %p70 = por %p68, %p69
      %p72 = scmp.ne.s32.totalorder %s55, %s71
      %p73 = scmp.eq.s32.totalorder %s21, 0
      %p74 = por %p72, %p73
      %s76 = sadd.s32 %s75, 1
      %p79 = scmp.eq.s32.totalorder %s15, 3
      %p80 = scmp.ne.s32.totalorder %s75, %s77
      %p81 = scmp.eq.s32.totalorder %s15, 0
      %p82 = por %p80, %p81
      %p83 = scmp.ne.s32.totalorder %s75, %s77
      %p84 = scmp.eq.s32.totalorder %s20, 3
      %p85 = por %p83, %p84
      %p86 = scmp.ne.s32.totalorder %s77, %s78
      %p87 = scmp.eq.s32.totalorder %s20, 0
      %p88 = por %p86, %p87
      %p89 = scmp.ne.s32.totalorder %s77, %s78
      %p90 = scmp.eq.s32.totalorder %s21, 3
      %p91 = por %p89, %p90
      %p93 = scmp.ne.s32.totalorder %s78, %s92
      %p94 = scmp.eq.s32.totalorder %s21, 0
      %p95 = por %p93, %p94
      %p96 = scmp.le.s32.totalorder 1, %s15
      %p97 = scmp.lt.s32.totalorder %s15, 5
      %p98 = pnand %p96, %p97
      %p99 = pneg %p98
      // Predicated region
      $region9: #{tpu_custom_call.1} parent=5 // pred_check
        _
      $region10: #{tpu_custom_call.1} parent=5 // pred_check_branch
        %101 = sbr.rel (%p98) target = $region12
      $region11: #{tpu_custom_call.1} parent=5 // pred_region
        %s102 = ssub.s32 %s15, 1
      $region12: #{tpu_custom_call.1} parent=5 // pred_fallthru
        _
      %p103 = scmp.lt.s32.totalorder %s15, 4
      // Predicated region
      $region13: #{tpu_custom_call.1} parent=5 // pred_check
        %p104 = pneg %p103
      $region14: #{tpu_custom_call.1} parent=5 // pred_check_branch
        %106 = sbr.rel (%p104) target = $region16
      $region15: #{tpu_custom_call.1} parent=5 // pred_region
        // Predicated region
        $region17: #{tpu_custom_call.1} parent=15 // pred_check
          %p107 = pneg %p35
        $region18: #{tpu_custom_call.1} parent=15 // pred_check_branch
          %109 = sbr.rel (%p107) target = $region20
        $region19: #{tpu_custom_call.1} parent=15 // pred_region
          %s110 = sand.u32 %s25, 1
          %s111 = scalar_lea.sflag [#allocation9], %s110
          %s112 = sand.u32 %s25, 1
          %s113 = smul.addr %s112, 8
          %s114 = scalar_lea.vmem [#allocation8], %s113
          %s116 = ssub.s32 128, 128
          %117 = vsyncadd %s111, %s116
          %s118 = smul.addr %s15, 128
          %s119 = scalar_lea.hbm %s0, %s118
          %s121 = sshll.u32 %s114, 4
          %s122 = int_to_ptr.vmem [resolvable:$true] %s121
          %124 = dma.hbm_to_vmem [thread:$0]  %s119, 128, %s122, %s111
        $region20: #{tpu_custom_call.1} parent=15 // pred_fallthru
          _
        // Predicated region
        $region21: #{tpu_custom_call.1} parent=15 // pred_check
          %p125 = pneg %p61
        $region22: #{tpu_custom_call.1} parent=15 // pred_check_branch
          %127 = sbr.rel (%p125) target = $region24
        $region23: #{tpu_custom_call.1} parent=15 // pred_region
          %s128 = sand.u32 %s51, 1
          %s129 = scalar_lea.sflag [#allocation12], %s128
          %s130 = sand.u32 %s51, 1
          %s131 = smul.addr %s130, 8
          %s132 = scalar_lea.vmem [#allocation11], %s131
          %s134 = ssub.s32 128, 128
          %135 = vsyncadd %s129, %s134
          %s136 = smul.addr %s15, 128
          %s137 = scalar_lea.hbm %s1, %s136
          %s139 = sshll.u32 %s132, 4
          %s140 = int_to_ptr.vmem [resolvable:$true] %s139
          %142 = dma.hbm_to_vmem [thread:$0]  %s137, 128, %s140, %s129
        $region24: #{tpu_custom_call.1} parent=15 // pred_fallthru
          _
      $region16: #{tpu_custom_call.1} parent=5 // pred_fallthru
        _
      %p143 = scmp.le.s32.totalorder 1, %s15
      %p144 = scmp.lt.s32.totalorder %s15, 5
      %p145 = pnand %p143, %p144
      %p146 = pneg %p145
      // Predicated region
      $region25: #{tpu_custom_call.1} parent=5 // pred_check
        _
      $region26: #{tpu_custom_call.1} parent=5 // pred_check_branch
        %148 = sbr.rel (%p145) target = $region28
      $region27: #{tpu_custom_call.1} parent=5 // pred_region
        %s149 = ssub.s32 %s15, 1
        %s150 = sand.u32 %s28, 1
        %s151 = scalar_lea.sflag [#allocation9], %s150
        %s152 = sand.u32 %s28, 1
        %s153 = smul.addr %s152, 8
        %s154 = scalar_lea.vmem [#allocation8], %s153
        // Predicated region
        $region29: #{tpu_custom_call.1} parent=27 // pred_check
          %p155 = pneg %p41
        $region30: #{tpu_custom_call.1} parent=27 // pred_check_branch
          %157 = sbr.rel (%p155) target = $region32
        $region31: #{tpu_custom_call.1} parent=27 // pred_region
          %158 = dma.done %s151, 128
        $region32: #{tpu_custom_call.1} parent=27 // pred_fallthru
          _
        %s159 = sand.u32 %s54, 1
        %s160 = scalar_lea.sflag [#allocation12], %s159
        %s161 = sand.u32 %s54, 1
        %s162 = smul.addr %s161, 8
        %s163 = scalar_lea.vmem [#allocation11], %s162
        // Predicated region
        $region33: #{tpu_custom_call.1} parent=27 // pred_check
          %p164 = pneg %p67
        $region34: #{tpu_custom_call.1} parent=27 // pred_check_branch
          %166 = sbr.rel (%p164) target = $region36
        $region35: #{tpu_custom_call.1} parent=27 // pred_region
          %167 = dma.done %s160, 128
        $region36: #{tpu_custom_call.1} parent=27 // pred_fallthru
          _
        %s168 = sand.u32 %s28, 1
        %s169 = scalar_lea.sflag [#allocation9], %s168
        %s170 = sand.u32 %s28, 1
        %s171 = smul.addr %s170, 8
        %s172 = scalar_lea.vmem [#allocation8], %s171
        %p173 = pneg %p41
        %p174 = pneg %p38
        %s175 = sand.u32 %s54, 1
        %s176 = scalar_lea.sflag [#allocation12], %s175
        %s177 = sand.u32 %s54, 1
        %s178 = smul.addr %s177, 8
        %s179 = scalar_lea.vmem [#allocation11], %s178
        %p180 = pneg %p67
        %p181 = pneg %p64
        %p182 = pneg %p88
        %p183 = pneg %p85
        %p184 = scmp.eq.s32.totalorder %s20, 0
        // Predicated region
        $region37: #{tpu_custom_call.1} parent=27 // pred_check
          %p185 = pneg %p184
        $region38: #{tpu_custom_call.1} parent=27 // pred_check_branch
          %187 = sbr.rel (%p185) target = $region40
        $region39: #{tpu_custom_call.1} parent=27 // pred_region
          %188 = vst [vmem:[#allocation2] sm:$0xff] 0.0
          %189 = vst [vmem:[#allocation2 + $0x8] sm:$0xff] 0.0
          %190 = vst [vmem:[#allocation2 + $0x10] sm:$0xff] 0.0
          %191 = vst [vmem:[#allocation2 + $0x18] sm:$0xff] 0.0
          %192 = vst [vmem:[#allocation2 + $0x20] sm:$0xff] 0.0
          %193 = vst [vmem:[#allocation2 + $0x28] sm:$0xff] 0.0
          %194 = vst [vmem:[#allocation2 + $0x30] sm:$0xff] 0.0
          %195 = vst [vmem:[#allocation2 + $0x38] sm:$0xff] 0.0
          %196 = vst [vmem:[#allocation2 + $0x40] sm:$0xff] 0.0
          %197 = vst [vmem:[#allocation2 + $0x48] sm:$0xff] 0.0
          %198 = vst [vmem:[#allocation2 + $0x50] sm:$0xff] 0.0
          %199 = vst [vmem:[#allocation2 + $0x58] sm:$0xff] 0.0
          %200 = vst [vmem:[#allocation2 + $0x60] sm:$0xff] 0.0
          %201 = vst [vmem:[#allocation2 + $0x68] sm:$0xff] 0.0
          %202 = vst [vmem:[#allocation2 + $0x70] sm:$0xff] 0.0
          %203 = vst [vmem:[#allocation2 + $0x78] sm:$0xff] 0.0
          %204 = vst [vmem:[#allocation3] sm:$0x1] 0.0
          %205 = vst [vmem:[#allocation4] sm:$0x1] 0.0
          %206 = vst [vmem:[#allocation5] sm:$0x1] 0.0
          %207 = vst [vmem:[#allocation6] sm:$0x1] 0.0
          %208 = vst [vmem:[#allocation7] sm:$0x1] 0.0
        $region40: #{tpu_custom_call.1} parent=27 // pred_fallthru
          _
        %v209 = vld [vmem:[%s154] sm:$0xff]
        %v210 = vld [vmem:[%s163] sm:$0xff]
        %v211 = vld [vmem:[#allocation2] sm:$0xff]
        %v212 = vld [vmem:[#allocation2 + $0x8] sm:$0xff]
        %v213 = vld [vmem:[#allocation2 + $0x10] sm:$0xff]
        %v214 = vld [vmem:[#allocation2 + $0x18] sm:$0xff]
        %v215 = vld [vmem:[#allocation2 + $0x20] sm:$0xff]
        %v216 = vld [vmem:[#allocation2 + $0x28] sm:$0xff]
        %v217 = vld [vmem:[#allocation2 + $0x30] sm:$0xff]
        %v218 = vld [vmem:[#allocation2 + $0x38] sm:$0xff]
        %v219 = vld [vmem:[#allocation2 + $0x40] sm:$0xff]
        %v220 = vld [vmem:[#allocation2 + $0x48] sm:$0xff]
        %v221 = vld [vmem:[#allocation2 + $0x50] sm:$0xff]
        %v222 = vld [vmem:[#allocation2 + $0x58] sm:$0xff]
        %v223 = vld [vmem:[#allocation2 + $0x60] sm:$0xff]
        %v224 = vld [vmem:[#allocation2 + $0x68] sm:$0xff]
        %v225 = vld [vmem:[#allocation2 + $0x70] sm:$0xff]
        %v226 = vld [vmem:[#allocation2 + $0x78] sm:$0xff]
        %227 = vxpose.xlu0.b32.start [1/16] %v209, 128
        %228 = vxpose.xlu0.b32.cont [2/16] 0.0, 128
        %229 = vxpose.xlu0.b32.cont [3/16] 0.0, 128
        %230 = vxpose.xlu0.b32.cont [4/16] 0.0, 128
        %231 = vxpose.xlu0.b32.cont [5/16] 0.0, 128
        %232 = vxpose.xlu0.b32.cont [6/16] 0.0, 128
        %233 = vxpose.xlu0.b32.cont [7/16] 0.0, 128
        %234 = vxpose.xlu0.b32.cont [8/16] 0.0, 128
        %235 = vxpose.xlu0.b32.cont [9/16] 0.0, 128
        %236 = vxpose.xlu0.b32.cont [10/16] 0.0, 128
        %237 = vxpose.xlu0.b32.cont [11/16] 0.0, 128
        %238 = vxpose.xlu0.b32.cont [12/16] 0.0, 128
        %239 = vxpose.xlu0.b32.cont [13/16] 0.0, 128
        %240 = vxpose.xlu0.b32.cont [14/16] 0.0, 128
        %241 = vxpose.xlu0.b32.cont [15/16] 0.0, 128
        %242 = vxpose.xlu0.b32.end [16/16] 0.0, 128
        %v243 = vpop.trf.xlu0
        %v244 = vpop.trf.xlu0
        %v245 = vpop.trf.xlu0
        %v246 = vpop.trf.xlu0
        %v247 = vpop.trf.xlu0
        %v248 = vpop.trf.xlu0
        %v249 = vpop.trf.xlu0
        %v250 = vpop.trf.xlu0
        %v251 = vpop.trf.xlu0
        %v252 = vpop.trf.xlu0
        %v253 = vpop.trf.xlu0
        %v254 = vpop.trf.xlu0
        %v255 = vpop.trf.xlu0
        %v256 = vpop.trf.xlu0
        %v257 = vpop.trf.xlu0
        %v258 = vpop.trf.xlu0
        %vm259 = vcmask 64512
        %v261 = vsel %vm259, %v243, 0
        %v264 = vsel %vm259, %v244, 0
        %v267 = vsel %vm259, %v245, 0
        %v270 = vsel %vm259, %v246, 0
        %v273 = vsel %vm259, %v247, 0
        %v276 = vsel %vm259, %v248, 0
        %v279 = vsel %vm259, %v249, 0
        %v282 = vsel %vm259, %v250, 0
        %v285 = vsel %vm259, %v251, 0
        %v288 = vsel %vm259, %v252, 0
        %v291 = vsel %vm259, %v253, 0
        %v294 = vsel %vm259, %v254, 0
        %v297 = vsel %vm259, %v255, 0
        %v300 = vsel %vm259, %v256, 0
        %v303 = vsel %vm259, %v257, 0
        %v306 = vsel %vm259, %v258, 0
        %308 = vmatprep.subr.mxu0 0.0
        %309 = vmatpush1.msra.mxu0 %v210
        %310 = vmatprep.subr.mxu0 0.0
        %311 = vmatpush1.msra.mxu0 0.0
        %312 = vmatprep.subr.mxu0 0.0
        %313 = vmatpush1.msra.mxu0 0.0
        %314 = vmatprep.subr.mxu0 0.0
        %315 = vmatpush1.msra.mxu0 0.0
        %316 = vmatprep.subr.mxu0 0.0
        %317 = vmatpush1.msra.mxu0 0.0
        %318 = vmatprep.subr.mxu0 0.0
        %319 = vmatpush1.msra.mxu0 0.0
        %320 = vmatprep.subr.mxu0 0.0
        %321 = vmatpush1.msra.mxu0 0.0
        %322 = vmatprep.subr.mxu0 0.0
        %323 = vmatpush1.msra.mxu0 0.0
        %324 = vmatprep.subr.mxu0 0.0
        %325 = vmatpush1.msra.mxu0 0.0
        %326 = vmatprep.subr.mxu0 0.0
        %327 = vmatpush1.msra.mxu0 0.0
        %328 = vmatprep.subr.mxu0 0.0
        %329 = vmatpush1.msra.mxu0 0.0
        %330 = vmatprep.subr.mxu0 0.0
        %331 = vmatpush1.msra.mxu0 0.0
        %332 = vmatprep.subr.mxu0 0.0
        %333 = vmatpush1.msra.mxu0 0.0
        %334 = vmatprep.subr.mxu0 0.0
        %335 = vmatpush1.msra.mxu0 0.0
        %336 = vmatprep.subr.mxu0 0.0
        %337 = vmatpush1.msra.mxu0 0.0
        %338 = vmatprep.subr.mxu0 0.0
        %339 = vmatpush1.msra.mxu0 0.0
        %340 = vmatprep.subr.mxu0 0.0
        %341 = vmatpush1.msra.mxu0 0.0
        %342 = vmatprep.subr.mxu0 0.0
        %343 = vmatpush1.msra.mxu0 0.0
        %344 = vmatprep.subr.mxu0 0.0
        %345 = vmatpush1.msra.mxu0 0.0
        %346 = vmatprep.subr.mxu0 0.0
        %347 = vmatpush1.msra.mxu0 0.0
        %348 = vmatprep.subr.mxu0 0.0
        %349 = vmatpush1.msra.mxu0 0.0
        %350 = vmatprep.subr.mxu0 0.0
        %351 = vmatpush1.msra.mxu0 0.0
        %352 = vmatprep.subr.mxu0 0.0
        %353 = vmatpush1.msra.mxu0 0.0
        %354 = vmatprep.subr.mxu0 0.0
        %355 = vmatpush1.msra.mxu0 0.0
        %356 = vmatprep.subr.mxu0 0.0
        %357 = vmatpush1.msra.mxu0 0.0
        %358 = vmatprep.subr.mxu0 0.0
        %359 = vmatpush1.msra.mxu0 0.0
        %360 = vmatprep.subr.mxu0 0.0
        %361 = vmatpush1.msra.mxu0 0.0
        %362 = vmatprep.subr.mxu0 0.0
        %363 = vmatpush1.msra.mxu0 0.0
        %364 = vmatprep.subr.mxu0 0.0
        %365 = vmatpush1.msra.mxu0 0.0
        %366 = vmatprep.subr.mxu0 0.0
        %367 = vmatpush1.msra.mxu0 0.0
        %368 = vmatprep.subr.mxu0 0.0
        %369 = vmatpush1.msra.mxu0 0.0
        %370 = vmatprep.subr.mxu0 0.0
        %371 = vmatpush1.msra.mxu0 0.0
        %372 = vmatprep.mubr.f32.mxu0 0.0
        %373 = vmatmul.mubr.f32.gmra.mrb[0].mxu0 %v261
        %v374 = vpop.f32.mrb[0].mxu0
        %v375 = vadd.f32 0.0, %v374
        %v376 = vpop.f32.mrb[0].mxu0
        %377 = vmatprep.mubr.f32.mxu0 0.0
        %378 = vmatmul.mubr.f32.gmra.mrb[0].mxu0 %v264
        %v379 = vpop.f32.mrb[0].mxu0
        %v380 = vadd.f32 0.0, %v379
        %v381 = vpop.f32.mrb[0].mxu0
        %382 = vmatprep.mubr.f32.mxu0 0.0
        %383 = vmatmul.mubr.f32.gmra.mrb[0].mxu0 %v267
        %v384 = vpop.f32.mrb[0].mxu0
        %v385 = vadd.f32 0.0, %v384
        %v386 = vpop.f32.mrb[0].mxu0
        %387 = vmatprep.mubr.f32.mxu0 0.0
        %388 = vmatmul.mubr.f32.gmra.mrb[0].mxu0 %v270
        %v389 = vpop.f32.mrb[0].mxu0
        %v390 = vadd.f32 0.0, %v389
        %v391 = vpop.f32.mrb[0].mxu0
        %392 = vmatprep.mubr.f32.mxu0 0.0
        %393 = vmatmul.mubr.f32.gmra.mrb[0].mxu0 %v273
        %v394 = vpop.f32.mrb[0].mxu0
        %v395 = vadd.f32 0.0, %v394
        %v396 = vpop.f32.mrb[0].mxu0
        %397 = vmatprep.mubr.f32.mxu0 0.0
        %398 = vmatmul.mubr.f32.gmra.mrb[0].mxu0 %v276
        %v399 = vpop.f32.mrb[0].mxu0
        %v400 = vadd.f32 0.0, %v399
        %v401 = vpop.f32.mrb[0].mxu0
        %402 = vmatprep.mubr.f32.mxu0 0.0
        %403 = vmatmul.mubr.f32.gmra.mrb[0].mxu0 %v279
        %v404 = vpop.f32.mrb[0].mxu0
        %v405 = vadd.f32 0.0, %v404
        %v406 = vpop.f32.mrb[0].mxu0
        %407 = vmatprep.mubr.f32.mxu0 0.0
        %408 = vmatmul.mubr.f32.gmra.mrb[0].mxu0 %v282
        %v409 = vpop.f32.mrb[0].mxu0
        %v410 = vadd.f32 0.0, %v409
        %v411 = vpop.f32.mrb[0].mxu0
        %412 = vmatprep.mubr.f32.mxu0 0.0
        %413 = vmatmul.mubr.f32.gmra.mrb[0].mxu0 %v285
        %v414 = vpop.f32.mrb[0].mxu0
        %v415 = vadd.f32 0.0, %v414
        %v416 = vpop.f32.mrb[0].mxu0
        %417 = vmatprep.mubr.f32.mxu0 0.0
        %418 = vmatmul.mubr.f32.gmra.mrb[0].mxu0 %v288
        %v419 = vpop.f32.mrb[0].mxu0
        %v420 = vadd.f32 0.0, %v419
        %v421 = vpop.f32.mrb[0].mxu0
        %422 = vmatprep.mubr.f32.mxu0 0.0
        %423 = vmatmul.mubr.f32.gmra.mrb[0].mxu0 %v291
        %v424 = vpop.f32.mrb[0].mxu0
        %v425 = vadd.f32 0.0, %v424
        %v426 = vpop.f32.mrb[0].mxu0
        %427 = vmatprep.mubr.f32.mxu0 0.0
        %428 = vmatmul.mubr.f32.gmra.mrb[0].mxu0 %v294
        %v429 = vpop.f32.mrb[0].mxu0
        %v430 = vadd.f32 0.0, %v429
        %v431 = vpop.f32.mrb[0].mxu0
        %432 = vmatprep.mubr.f32.mxu0 0.0
        %433 = vmatmul.mubr.f32.gmra.mrb[0].mxu0 %v297
        %v434 = vpop.f32.mrb[0].mxu0
        %v435 = vadd.f32 0.0, %v434
        %v436 = vpop.f32.mrb[0].mxu0
        %437 = vmatprep.mubr.f32.mxu0 0.0
        %438 = vmatmul.mubr.f32.gmra.mrb[0].mxu0 %v300
        %v439 = vpop.f32.mrb[0].mxu0
        %v440 = vadd.f32 0.0, %v439
        %v441 = vpop.f32.mrb[0].mxu0
        %442 = vmatprep.mubr.f32.mxu0 0.0
        %443 = vmatmul.mubr.f32.gmra.mrb[0].mxu0 %v303
        %v444 = vpop.f32.mrb[0].mxu0
        %v445 = vadd.f32 0.0, %v444
        %v446 = vpop.f32.mrb[0].mxu0
        %447 = vmatprep.mubr.f32.mxu0 0.0
        %448 = vmatmul.mubr.f32.gmra.mrb[0].mxu0 %v306
        %v449 = vpop.f32.mrb[0].mxu0
        %v450 = vadd.f32 0.0, %v449
        %v451 = vpop.f32.mrb[0].mxu0
        %452 = vdwg.mxu0
        %v453 = vadd.f32 %v211, %v375
        %v454 = vadd.f32 %v212, %v380
        %v455 = vadd.f32 %v213, %v385
        %v456 = vadd.f32 %v214, %v390
        %v457 = vadd.f32 %v215, %v395
        %v458 = vadd.f32 %v216, %v400
        %v459 = vadd.f32 %v217, %v405
        %v460 = vadd.f32 %v218, %v410
        %v461 = vadd.f32 %v219, %v415
        %v462 = vadd.f32 %v220, %v420
        %v463 = vadd.f32 %v221, %v425
        %v464 = vadd.f32 %v222, %v430
        %v465 = vadd.f32 %v223, %v435
        %v466 = vadd.f32 %v224, %v440
        %v467 = vadd.f32 %v225, %v445
        %v468 = vadd.f32 %v226, %v450
        %469 = vst [vmem:[#allocation2] sm:$0xff] %v453
        %470 = vst [vmem:[#allocation2 + $0x8] sm:$0xff] %v454
        %471 = vst [vmem:[#allocation2 + $0x10] sm:$0xff] %v455
        %472 = vst [vmem:[#allocation2 + $0x18] sm:$0xff] %v456
        %473 = vst [vmem:[#allocation2 + $0x20] sm:$0xff] %v457
        %474 = vst [vmem:[#allocation2 + $0x28] sm:$0xff] %v458
        %475 = vst [vmem:[#allocation2 + $0x30] sm:$0xff] %v459
        %476 = vst [vmem:[#allocation2 + $0x38] sm:$0xff] %v460
        %477 = vst [vmem:[#allocation2 + $0x40] sm:$0xff] %v461
        %478 = vst [vmem:[#allocation2 + $0x48] sm:$0xff] %v462
        %479 = vst [vmem:[#allocation2 + $0x50] sm:$0xff] %v463
        %480 = vst [vmem:[#allocation2 + $0x58] sm:$0xff] %v464
        %481 = vst [vmem:[#allocation2 + $0x60] sm:$0xff] %v465
        %482 = vst [vmem:[#allocation2 + $0x68] sm:$0xff] %v466
        %483 = vst [vmem:[#allocation2 + $0x70] sm:$0xff] %v467
        %484 = vst [vmem:[#allocation2 + $0x78] sm:$0xff] %v468
        %v485 = vld [vmem:[#allocation3] sm:$0x1]
        %v486 = vrot.slane %v209, 4
        %v487 = vadd.f32 %v209, %v486
        %v488 = vrot.slane %v487, 2
        %v489 = vadd.f32 %v487, %v488
        %v490 = vrot.slane %v489, 1
        %v491 = vadd.f32 %v489, %v490
        %v492 = vadd.f32 %v485, %v491
        %493 = vst [vmem:[#allocation3] sm:$0x1] %v492
        %v494 = vld [vmem:[#allocation4] sm:$0x1]
        %v495 = vrot.slane %v210, 4
        %v496 = vadd.f32 %v210, %v495
        %v497 = vrot.slane %v496, 2
        %v498 = vadd.f32 %v496, %v497
        %v499 = vrot.slane %v498, 1
        %v500 = vadd.f32 %v498, %v499
        %v501 = vadd.f32 %v494, %v500
        %502 = vst [vmem:[#allocation4] sm:$0x1] %v501
        %v503 = vld [vmem:[#allocation5] sm:$0x1]
        %v504 = vmul.f32 %v209, %v209
        %v505 = vrot.slane %v504, 4
        %v506 = vadd.f32 %v504, %v505
        %v507 = vrot.slane %v506, 2
        %v508 = vadd.f32 %v506, %v507
        %v509 = vrot.slane %v508, 1
        %v510 = vadd.f32 %v508, %v509
        %v511 = vadd.f32 %v503, %v510
        %512 = vst [vmem:[#allocation5] sm:$0x1] %v511
        %v513 = vld [vmem:[#allocation6] sm:$0x1]
        %v514 = vmul.f32 %v210, %v210
        %v515 = vrot.slane %v514, 4
        %v516 = vadd.f32 %v514, %v515
        %v517 = vrot.slane %v516, 2
        %v518 = vadd.f32 %v516, %v517
        %v519 = vrot.slane %v518, 1
        %v520 = vadd.f32 %v518, %v519
        %v521 = vadd.f32 %v513, %v520
        %522 = vst [vmem:[#allocation6] sm:$0x1] %v521
        %v523 = vld [vmem:[#allocation7] sm:$0x1]
        %v524 = vmul.f32 %v209, %v210
        %v525 = vrot.slane %v524, 4
        %v526 = vadd.f32 %v524, %v525
        %v527 = vrot.slane %v526, 2
        %v528 = vadd.f32 %v526, %v527
        %v529 = vrot.slane %v528, 1
        %v530 = vadd.f32 %v528, %v529
        %v531 = vadd.f32 %v523, %v530
        %532 = vst [vmem:[#allocation7] sm:$0x1] %v531
        %p533 = scmp.eq.s32.totalorder %s20, 3
        // Predicated region
        $region41: #{tpu_custom_call.1} parent=27 // pred_check
          %p534 = pneg %p533
        $region42: #{tpu_custom_call.1} parent=27 // pred_check_branch
          %536 = sbr.rel (%p534) target = $region44
        $region43: #{tpu_custom_call.1} parent=27 // pred_region
          %v537 = vld [vmem:[#allocation3] sm:$0x1]
          %v538 = vmul.f32 %v537, 0.03125
          %v539 = vld [vmem:[#allocation4] sm:$0x1]
          %v540 = vmul.f32 %v539, 0.03125
          %v541 = vld [vmem:[#allocation5] sm:$0x1]
          %v542 = vmul.f32 %v541, 0.03125
          %v543 = vmul.f32 %v538, %v538
          %v544 = vsub.f32 %v542, %v543
          %v545 = vld [vmem:[#allocation6] sm:$0x1]
          %v546 = vmul.f32 %v545, 0.03125
          %v547 = vmul.f32 %v540, %v540
          %v548 = vsub.f32 %v546, %v547
          %v549 = vadd.f32 %v544, 1e-05
          %v550 = vrsqrt.pop %v549
          %v551 = vadd.f32 %v548, 1e-05
          %v552 = vrsqrt.pop %v551
          %v553 = vld [vmem:[#allocation7] sm:$0x1]
          %v554 = vmul.f32 %v553, 0.03125
          %v555 = vmul.f32 %v538, %v540
          %v556 = vsub.f32 %v554, %v555
          %v557 = vmul.f32 %v556, %v550
          %v558 = vmul.f32 %v557, %v552
          %vm559 = vcmask 1040384
          %v560 = vsel %vm559, %v558, 0.0
          %561 = vadd.xlane.f32.xlu0 %v560
          %v562 = vpop.xlane.xlu0 %561
          %v563 = vrot.slane %v562, 4
          %v564 = vadd.f32 %v562, %v563
          %v565 = vrot.slane %v564, 2
          %v566 = vadd.f32 %v564, %v565
          %v567 = vrot.slane %v566, 1
          %v568 = vadd.f32 %v566, %v567
          %s569 = vtos %v568
          %v570 = vmul.f32 %v558, %v558
          %v571 = vsel %vm559, %v570, 0.0
          %572 = vadd.xlane.f32.xlu0 %v571
          %v573 = vpop.xlane.xlu0 %572
          %v574 = vrot.slane %v573, 4
          %v575 = vadd.f32 %v573, %v574
          %v576 = vrot.slane %v575, 2
          %v577 = vadd.f32 %v575, %v576
          %v578 = vrot.slane %v577, 1
          %v579 = vadd.f32 %v577, %v578
          %s580 = vtos %v579
          %v581 = vmul.f32 %v550, %v550
          %v582 = vmul.f32 %v552, %v552
          %v583 = vld [vmem:[#allocation2] sm:$0xff]
          %v584 = vld [vmem:[#allocation2 + $0x8] sm:$0xff]
          %v585 = vld [vmem:[#allocation2 + $0x10] sm:$0xff]
          %v586 = vld [vmem:[#allocation2 + $0x18] sm:$0xff]
          %v587 = vld [vmem:[#allocation2 + $0x20] sm:$0xff]
          %v588 = vld [vmem:[#allocation2 + $0x28] sm:$0xff]
          %v589 = vld [vmem:[#allocation2 + $0x30] sm:$0xff]
          %v590 = vld [vmem:[#allocation2 + $0x38] sm:$0xff]
          %v591 = vld [vmem:[#allocation2 + $0x40] sm:$0xff]
          %v592 = vld [vmem:[#allocation2 + $0x48] sm:$0xff]
          %v593 = vld [vmem:[#allocation2 + $0x50] sm:$0xff]
          %v594 = vld [vmem:[#allocation2 + $0x58] sm:$0xff]
          %v595 = vld [vmem:[#allocation2 + $0x60] sm:$0xff]
          %v596 = vld [vmem:[#allocation2 + $0x68] sm:$0xff]
          %v597 = vld [vmem:[#allocation2 + $0x70] sm:$0xff]
          %v598 = vld [vmem:[#allocation2 + $0x78] sm:$0xff]
          %v599 = vmul.f32 %v583, %v583
          %v600 = vmul.f32 %v584, %v584
          %v601 = vmul.f32 %v585, %v585
          %v602 = vmul.f32 %v586, %v586
          %v603 = vmul.f32 %v587, %v587
          %v604 = vmul.f32 %v588, %v588
          %v605 = vmul.f32 %v589, %v589
          %v606 = vmul.f32 %v590, %v590
          %v607 = vmul.f32 %v591, %v591
          %v608 = vmul.f32 %v592, %v592
          %v609 = vmul.f32 %v593, %v593
          %v610 = vmul.f32 %v594, %v594
          %v611 = vmul.f32 %v595, %v595
          %v612 = vmul.f32 %v596, %v596
          %v613 = vmul.f32 %v597, %v597
          %v614 = vmul.f32 %v598, %v598
          %615 = vmatprep.subr.mxu0 0.0
          %616 = vmatpush1.msra.mxu0 %v599
          %617 = vmatprep.subr.mxu0 0.0
          %618 = vmatpush1.msra.mxu0 %v600
          %619 = vmatprep.subr.mxu0 0.0
          %620 = vmatpush1.msra.mxu0 %v601
          %621 = vmatprep.subr.mxu0 0.0
          %622 = vmatpush1.msra.mxu0 %v602
          %623 = vmatprep.subr.mxu0 0.0
          %624 = vmatpush1.msra.mxu0 %v603
          %625 = vmatprep.subr.mxu0 0.0
          %626 = vmatpush1.msra.mxu0 %v604
          %627 = vmatprep.subr.mxu0 0.0
          %628 = vmatpush1.msra.mxu0 %v605
          %629 = vmatprep.subr.mxu0 0.0
          %630 = vmatpush1.msra.mxu0 %v606
          %631 = vmatprep.subr.mxu0 0.0
          %632 = vmatpush1.msra.mxu0 %v607
          %633 = vmatprep.subr.mxu0 0.0
          %634 = vmatpush1.msra.mxu0 %v608
          %635 = vmatprep.subr.mxu0 0.0
          %636 = vmatpush1.msra.mxu0 %v609
          %637 = vmatprep.subr.mxu0 0.0
          %638 = vmatpush1.msra.mxu0 %v610
          %639 = vmatprep.subr.mxu0 0.0
          %640 = vmatpush1.msra.mxu0 %v611
          %641 = vmatprep.subr.mxu0 0.0
          %642 = vmatpush1.msra.mxu0 %v612
          %643 = vmatprep.subr.mxu0 0.0
          %644 = vmatpush1.msra.mxu0 %v613
          %645 = vmatprep.subr.mxu0 0.0
          %646 = vmatpush1.msra.mxu0 %v614
          %647 = vmatprep.subr.mxu0 0.0
          %648 = vmatpush1.msra.mxu0 0.0
          %649 = vmatprep.subr.mxu0 0.0
          %650 = vmatpush1.msra.mxu0 0.0
          %651 = vmatprep.subr.mxu0 0.0
          %652 = vmatpush1.msra.mxu0 0.0
          %653 = vmatprep.subr.mxu0 0.0
          %654 = vmatpush1.msra.mxu0 0.0
          %655 = vmatprep.subr.mxu0 0.0
          %656 = vmatpush1.msra.mxu0 0.0
          %657 = vmatprep.subr.mxu0 0.0
          %658 = vmatpush1.msra.mxu0 0.0
          %659 = vmatprep.subr.mxu0 0.0
          %660 = vmatpush1.msra.mxu0 0.0
          %661 = vmatprep.subr.mxu0 0.0
          %662 = vmatpush1.msra.mxu0 0.0
          %663 = vmatprep.subr.mxu0 0.0
          %664 = vmatpush1.msra.mxu0 0.0
          %665 = vmatprep.subr.mxu0 0.0
          %666 = vmatpush1.msra.mxu0 0.0
          %667 = vmatprep.subr.mxu0 0.0
          %668 = vmatpush1.msra.mxu0 0.0
          %669 = vmatprep.subr.mxu0 0.0
          %670 = vmatpush1.msra.mxu0 0.0
          %671 = vmatprep.subr.mxu0 0.0
          %672 = vmatpush1.msra.mxu0 0.0
          %673 = vmatprep.subr.mxu0 0.0
          %674 = vmatpush1.msra.mxu0 0.0
          %675 = vmatprep.subr.mxu0 0.0
          %676 = vmatpush1.msra.mxu0 0.0
          %677 = vmatprep.subr.mxu0 0.0
          %678 = vmatpush1.msra.mxu0 0.0
          %679 = vmatprep.mubr.f32.mxu0 0.0
          %680 = vmatmul.mubr.f32.gmra.mrb[0].mxu0 %v581
          %v681 = vpop.f32.mrb[0].mxu0
          %v682 = vadd.f32 0.0, %v681
          %v683 = vpop.f32.mrb[0].mxu0
          %684 = vdwg.mxu0
          %v685 = vmul.f32 %v538, %v581
          %686 = vmatprep.subr.mxu0 0.0
          %687 = vmatpush1.msra.mxu0 %v583
          %688 = vmatprep.subr.mxu0 0.0
          %689 = vmatpush1.msra.mxu0 %v584
          %690 = vmatprep.subr.mxu0 0.0
          %691 = vmatpush1.msra.mxu0 %v585
          %692 = vmatprep.subr.mxu0 0.0
          %693 = vmatpush1.msra.mxu0 %v586
          %694 = vmatprep.subr.mxu0 0.0
          %695 = vmatpush1.msra.mxu0 %v587
          %696 = vmatprep.subr.mxu0 0.0
          %697 = vmatpush1.msra.mxu0 %v588
          %698 = vmatprep.subr.mxu0 0.0
          %699 = vmatpush1.msra.mxu0 %v589
          %700 = vmatprep.subr.mxu0 0.0
          %701 = vmatpush1.msra.mxu0 %v590
          %702 = vmatprep.subr.mxu0 0.0
          %703 = vmatpush1.msra.mxu0 %v591
          %704 = vmatprep.subr.mxu0 0.0
          %705 = vmatpush1.msra.mxu0 %v592
          %706 = vmatprep.subr.mxu0 0.0
          %707 = vmatpush1.msra.mxu0 %v593
          %708 = vmatprep.subr.mxu0 0.0
          %709 = vmatpush1.msra.mxu0 %v594
          %710 = vmatprep.subr.mxu0 0.0
          %711 = vmatpush1.msra.mxu0 %v595
          %712 = vmatprep.subr.mxu0 0.0
          %713 = vmatpush1.msra.mxu0 %v596
          %714 = vmatprep.subr.mxu0 0.0
          %715 = vmatpush1.msra.mxu0 %v597
          %716 = vmatprep.subr.mxu0 0.0
          %717 = vmatpush1.msra.mxu0 %v598
          %718 = vmatprep.subr.mxu0 0.0
          %719 = vmatpush1.msra.mxu0 0.0
          %720 = vmatprep.subr.mxu0 0.0
          %721 = vmatpush1.msra.mxu0 0.0
          %722 = vmatprep.subr.mxu0 0.0
          %723 = vmatpush1.msra.mxu0 0.0
          %724 = vmatprep.subr.mxu0 0.0
          %725 = vmatpush1.msra.mxu0 0.0
          %726 = vmatprep.subr.mxu0 0.0
          %727 = vmatpush1.msra.mxu0 0.0
          %728 = vmatprep.subr.mxu0 0.0
          %729 = vmatpush1.msra.mxu0 0.0
          %730 = vmatprep.subr.mxu0 0.0
          %731 = vmatpush1.msra.mxu0 0.0
          %732 = vmatprep.subr.mxu0 0.0
          %733 = vmatpush1.msra.mxu0 0.0
          %734 = vmatprep.subr.mxu0 0.0
          %735 = vmatpush1.msra.mxu0 0.0
          %736 = vmatprep.subr.mxu0 0.0
          %737 = vmatpush1.msra.mxu0 0.0
          %738 = vmatprep.subr.mxu0 0.0
          %739 = vmatpush1.msra.mxu0 0.0
          %740 = vmatprep.subr.mxu0 0.0
          %741 = vmatpush1.msra.mxu0 0.0
          %742 = vmatprep.subr.mxu0 0.0
          %743 = vmatpush1.msra.mxu0 0.0
          %744 = vmatprep.subr.mxu0 0.0
          %745 = vmatpush1.msra.mxu0 0.0
          %746 = vmatprep.subr.mxu0 0.0
          %747 = vmatpush1.msra.mxu0 0.0
          %748 = vmatprep.subr.mxu0 0.0
          %749 = vmatpush1.msra.mxu0 0.0
          %750 = vmatprep.mubr.f32.mxu0 0.0
          %751 = vmatmul.mubr.f32.gmra.mrb[0].mxu0 %v685
          %v752 = vpop.f32.mrb[0].mxu0
          %v753 = vadd.f32 0.0, %v752
          %v754 = vpop.f32.mrb[0].mxu0
          %755 = vdwg.mxu0
          %v756 = vmul.f32 %v682, %v582
          %v757 = vsel %vm559, %v756, 0.0
          %758 = vadd.xlane.f32.xlu0 %v757
          %v759 = vpop.xlane.xlu0 %758
          %v760 = vrot.slane %v759, 4
          %v761 = vadd.f32 %v759, %v760
          %v762 = vrot.slane %v761, 2
          %v763 = vadd.f32 %v761, %v762
          %v764 = vrot.slane %v763, 1
          %v765 = vadd.f32 %v763, %v764
          %s766 = vtos %v765
          %s767 = smul.f32 %s766, 0.0009765625
          %v768 = vmul.f32 %v540, %v582
          %v769 = vmul.f32 %v753, %v768
          %v770 = vsel %vm559, %v769, 0.0
          %771 = vadd.xlane.f32.xlu0 %v770
          %v772 = vpop.xlane.xlu0 %771
          %v773 = vrot.slane %v772, 4
          %v774 = vadd.f32 %v772, %v773
          %v775 = vrot.slane %v774, 2
          %v776 = vadd.f32 %v774, %v775
          %v777 = vrot.slane %v776, 1
          %v778 = vadd.f32 %v776, %v777
          %s779 = vtos %v778
          %s780 = smul.f32 %s779, -0.0625
          %v781 = vmul.f32 %v543, %v581
          %v782 = vsel %vm559, %v781, 0.0
          %783 = vadd.xlane.f32.xlu0 %v782
          %v784 = vpop.xlane.xlu0 %783
          %v785 = vrot.slane %v784, 4
          %v786 = vadd.f32 %v784, %v785
          %v787 = vrot.slane %v786, 2
          %v788 = vadd.f32 %v786, %v787
          %v789 = vrot.slane %v788, 1
          %v790 = vadd.f32 %v788, %v789
          %s791 = vtos %v790
          %v792 = vmul.f32 %v547, %v582
          %v793 = vsel %vm559, %v792, 0.0
          %794 = vadd.xlane.f32.xlu0 %v793
          %v795 = vpop.xlane.xlu0 %794
          %v796 = vrot.slane %v795, 4
          %v797 = vadd.f32 %v795, %v796
          %v798 = vrot.slane %v797, 2
          %v799 = vadd.f32 %v797, %v798
          %v800 = vrot.slane %v799, 1
          %v801 = vadd.f32 %v799, %v800
          %s802 = vtos %v801
          %s803 = smul.f32 %s791, %s802
          %s804 = sadd.f32 %s767, %s780
          %s805 = sadd.f32 %s804, %s803
          %s806 = smul.f32 %s580, 0.9949
          %s807 = smul.f32 %s569, 2.0
          %s808 = ssub.f32 %s806, %s807
          %s809 = sadd.f32 %s808, 128.0
          %s810 = smul.f32 %s805, 0.0051
          %s811 = sadd.f32 %s809, %s810
          %s812 = scalar_lea.smem [#allocation13], 0
          %813 = sst [smem:[%s812]] %s811
        $region44: #{tpu_custom_call.1} parent=27 // pred_fallthru
          _
        // Predicated region
        $region45: #{tpu_custom_call.1} parent=27 // pred_check
          %p814 = pneg %p85
        $region46: #{tpu_custom_call.1} parent=27 // pred_check_branch
          %816 = sbr.rel (%p814) target = $region48
        $region47: #{tpu_custom_call.1} parent=27 // pred_region
          %s818 = ssub.s32 16, 16
          %819 = vsyncadd [#allocation10], %s818
          %822 = dma.smem_to_hbm [#allocation13], 16, %s2, [#allocation10]
        $region48: #{tpu_custom_call.1} parent=27 // pred_fallthru
          _
        // Predicated region
        $region49: #{tpu_custom_call.1} parent=27 // pred_check
          %p823 = pneg %p85
        $region50: #{tpu_custom_call.1} parent=27 // pred_check_branch
          %825 = sbr.rel (%p823) target = $region52
        $region51: #{tpu_custom_call.1} parent=27 // pred_region
          %826 = dma.done [#allocation10], 16
        $region52: #{tpu_custom_call.1} parent=27 // pred_fallthru
          _
        %827 = sfence
      $region28: #{tpu_custom_call.1} parent=5 // pred_fallthru
        _
      %p828 = scmp.le.s32.totalorder 2, %s15
      // Predicated region
      $region53: #{tpu_custom_call.1} parent=5 // pred_check
        %p829 = pneg %p828
      $region54: #{tpu_custom_call.1} parent=5 // pred_check_branch
        %831 = sbr.rel (%p829) target = $region56
      $region55: #{tpu_custom_call.1} parent=5 // pred_region
        %s832 = ssub.s32 %s15, 2
      $region56: #{tpu_custom_call.1} parent=5 // pred_fallthru
        _
    $region6: #{tpu_custom_call.1} parent=1 // loop_footer
      %s19 = sadd.s32 1, %s15
    $region7: #{tpu_custom_call.1} parent=1 // loop_footer_branch
      %14 = sbr.rel target = $region3
    $region8: #{tpu_custom_call.1} parent=1 // loop_exit
      _
    %833 = vsyncpa [#allocation9], 1
    %s834 = scalar_lea.sflag [#allocation9], 1
    %835 = vsyncpa %s834, 1
    %836 = vsyncpa [#allocation12], 1
    %s837 = scalar_lea.sflag [#allocation12], 1
    %838 = vsyncpa %s837, 1
    %839 = vsyncpa [#allocation10], 1
    %s840 = scalar_lea.sflag [#allocation10], 1
    %841 = vsyncpa %s840, 1

</llo_original>
